<compile_context>
chip_gen: v7x
topology: tpu7x:2x2x1
jax: 0.10.0
libtpu: 0.0.40
codegen_flags: <defaults>
</compile_context>

<pallas_src>
import jax
import jax.numpy as jnp
from jax.experimental import pallas as pl
from jax.experimental.pallas import tpu as pltpu


def _round_up(x, m):
    return ((x + m - 1) // m) * m


# ---------------------------------------------------------------------------
# Fused Pallas kernel:  out = A @ relu(A @ (X W1) + b1) @ W2 + b2
# ---------------------------------------------------------------------------
def fused_gnn_kernel(a_ref, x_ref, w1_ref, b1_ref, w2_ref, b2_ref, o_ref):
    # ---- layer 1: conv1 (+ bias) + ReLU -----------------------------------
    xw1 = jnp.dot(x_ref[...], w1_ref[...],
                  preferred_element_type=jnp.float32)            # [N, H] (MXU)
    h = jnp.dot(a_ref[...], xw1.astype(jnp.bfloat16),
                preferred_element_type=jnp.float32)              # [N, H] (MXU)
    h = jnp.maximum(h + b1_ref[...], 0.0)                        # f32 VPU
    # dropout(p=0.1) -> identity (eval mode)

    # ---- layer 2: conv2 (+ bias) ------------------------------------------
    hw2 = jnp.dot(h.astype(jnp.bfloat16), w2_ref[...],
                  preferred_element_type=jnp.float32)            # [N, E] (MXU)
    out = jnp.dot(a_ref[...], hw2.astype(jnp.bfloat16),
                  preferred_element_type=jnp.float32)            # [N, E] (MXU)
    o_ref[...] = (out + b2_ref[...]).astype(o_ref.dtype)


# ---------------------------------------------------------------------------
# One-time preparation (hoisted out of the forward path)
# ---------------------------------------------------------------------------
def build_normalized_adjacency(edge_index, num_nodes, n_pad=None):
    """Dense GCN norm D^-1/2 (A + I) D^-1/2, built directly at padded shape.

    Returns (a_p_bf16 [n_pad, n_pad], a_f32 [num_nodes, num_nodes]).
    This is the 'cached' part of CachedGCNConv: compute once per graph, reuse.
    Padded rows/cols are exactly zero (required masking invariant).
    """
    if n_pad is None:
        n_pad = _round_up(max(num_nodes, 16), 16)
    src, dst = edge_index[0], edge_index[1]
    a = jnp.zeros((n_pad, n_pad), jnp.float32)
    # message j -> i aggregated at target i  =>  A[dst, src] += 1
    a = a.at[dst, src].add(1.0)
    diag = jnp.arange(num_nodes)
    a = a.at[diag, diag].add(1.0)            # self-loops on real nodes only
    deg = a.sum(axis=1)
    d_inv_sqrt = jnp.where(deg > 0, 1.0 / jnp.sqrt(deg), 0.0)
    a_norm = d_inv_sqrt[:, None] * a * d_inv_sqrt[None, :]
    return a_norm.astype(jnp.bfloat16), a_norm[:num_nodes, :num_nodes]


def prepare_features(x, n_pad=None, f_pad=None):
    """Pad + cast node features once per graph: [n, f] f32 -> [n_pad, f_pad] bf16."""
    n, f_in = x.shape
    if n_pad is None:
        n_pad = _round_up(max(n, 16), 16)
    if f_pad is None:
        f_pad = _round_up(f_in, 128)
    return jnp.zeros((n_pad, f_pad), jnp.bfloat16).at[:n, :f_in].set(
        x.astype(jnp.bfloat16))


def prepare_params(params):
    """Pad + cast the two GCN layers' weights/biases once."""
    (w1, b1), (w2, b2) = params
    f_in, hidden = w1.shape
    enc = w2.shape[1]
    f_pad = _round_up(f_in, 128)
    h_pad = _round_up(hidden, 128)
    e_pad = _round_up(enc, 128)
    w1_p = jnp.zeros((f_pad, h_pad), jnp.bfloat16).at[:f_in, :hidden].set(
        w1.astype(jnp.bfloat16))
    b1_p = jnp.zeros((1, h_pad), jnp.float32).at[:, :hidden].set(b1)
    w2_p = jnp.zeros((h_pad, e_pad), jnp.bfloat16).at[:hidden, :enc].set(
        w2.astype(jnp.bfloat16))
    b2_p = jnp.zeros((1, e_pad), jnp.float32).at[:, :enc].set(b2)
    return ((w1_p, b1_p), (w2_p, b2_p))


# ---------------------------------------------------------------------------
# Forward: just the fused pallas_call (+ final slice). All padding is hoisted.
# ---------------------------------------------------------------------------
def gnn_forward(x_p, a_p, padded_params, num_nodes, encoder_dim):
    (w1_p, b1_p), (w2_p, b2_p) = padded_params
    n_pad = a_p.shape[0]
    f_pad = x_p.shape[1]
    h_pad = w1_p.shape[1]
    e_pad = w2_p.shape[1]

    flops = 2 * (n_pad * f_pad * h_pad      # X @ W1
                 + n_pad * n_pad * h_pad    # A @ XW1
                 + n_pad * h_pad * e_pad    # h @ W2
                 + n_pad * n_pad * e_pad)   # A @ hW2
    bytes_accessed = (
        (a_p.size + x_p.size + w1_p.size + w2_p.size) * 2   # bf16 inputs
        + (b1_p.size + b2_p.size) * 4                        # f32 biases
        + n_pad * e_pad * 4                                   # f32 output
    )

    # Gridless: the whole padded problem is one VMEM block (< 64 KiB here).
    # Scaling plan (not needed at these sizes):
    #   - v7x (64 MiB VMEM/TC): monolithic design holds up to N ~ 4k with
    #     vmem_limit_bytes <= ~56 MiB; beyond that, row-tile with the row axis
    #     first and dimension_semantics=("parallel", ...) to use both TCs,
    #     tm >= 256.
    #   - v5e/v6e (128 MiB): raise vmem_limit_bytes toward ~96-112 MiB before
    #     introducing a grid; 128-row tiles on v5e, 256 on v6e when gridding.
    out_p = pl.pallas_call(
        fused_gnn_kernel,
        out_shape=jax.ShapeDtypeStruct((n_pad, e_pad), jnp.float32),
        in_specs=[
            pl.BlockSpec((n_pad, n_pad), lambda: (0, 0)),    # A_hat (bf16)
            pl.BlockSpec((n_pad, f_pad), lambda: (0, 0)),    # X     (bf16)
            pl.BlockSpec((f_pad, h_pad), lambda: (0, 0)),    # W1    (bf16)
            pl.BlockSpec((1, h_pad), lambda: (0, 0)),        # b1    (f32)
            pl.BlockSpec((h_pad, e_pad), lambda: (0, 0)),    # W2    (bf16)
            pl.BlockSpec((1, e_pad), lambda: (0, 0)),        # b2    (f32)
        ],
        out_specs=pl.BlockSpec((n_pad, e_pad), lambda: (0, 0)),
        cost_estimate=pl.CostEstimate(
            flops=int(flops), transcendentals=0,
            bytes_accessed=int(bytes_accessed)),
        compiler_params=pltpu.CompilerParams(
            vmem_limit_bytes=32 * 1024 * 1024),
    )(a_p, x_p, w1_p, b1_p, w2_p, b2_p)

    return out_p[:num_nodes, :encoder_dim]


# ---------------------------------------------------------------------------
# Plain-JAX glue
# ---------------------------------------------------------------------------
def glorot(key, fan_in, fan_out):
    limit = jnp.sqrt(6.0 / (fan_in + fan_out))
    return jax.random.uniform(
        key, (fan_in, fan_out), jnp.float32, minval=-limit, maxval=limit)


def init_gnn_params(key, num_features, hidden_dim, encoder_dim):
    k1, k2 = jax.random.split(key)
    w1 = glorot(k1, num_features, hidden_dim)
    b1 = jnp.zeros((1, hidden_dim), jnp.float32)
    w2 = glorot(k2, hidden_dim, encoder_dim)
    b2 = jnp.zeros((1, encoder_dim), jnp.float32)
    return ((w1, b1), (w2, b2))


def gnn_reference(x, a_hat, params):
    """Pure-f32 JAX reference (eval-mode dropout = identity)."""
    (w1, b1), (w2, b2) = params
    h = jnp.maximum(a_hat @ (x @ w1) + b1, 0.0)
    return a_hat @ (h @ w2) + b2


# ---------------------------------------------------------------------------
if __name__ == "__main__":
    key = jax.random.PRNGKey(0)
    k_x, k_e, k_p = jax.random.split(key, 3)

    num_nodes = 32        # small graph
    num_features = 16     # dataset.num_features
    hidden_dim = 128      # first conv output (fixed at 128 in the module)
    encoder_dim = 32      # args.encoder_dim
    num_edges = 64

    x = jax.random.normal(k_x, (num_nodes, num_features), jnp.float32)
    src = jax.random.randint(k_e, (num_edges,), 0, num_nodes)
    dst = (src + 1 + jax.random.randint(
        jax.random.fold_in(k_e, 1), (num_edges,), 0, num_nodes - 1)) % num_nodes
    edge_index = jnp.stack([src, dst]).astype(jnp.int32)   # [2, E]

    # ---- one-time ("cached") preparation: padded bf16 A_hat / X / params ---
    params = init_gnn_params(k_p, num_features, hidden_dim, encoder_dim)
    n_pad = _round_up(max(num_nodes, 16), 16)               # 32 (not 128!)
    a_p, a_hat_f32 = build_normalized_adjacency(edge_index, num_nodes, n_pad)
    x_p = prepare_features(x, n_pad=n_pad)
    params_p = prepare_params(params)

    # ---- fused forward ------------------------------------------------------
    out = gnn_forward(x_p, a_p, params_p, num_nodes, encoder_dim)
    out = jax.block_until_ready(out)

    ref = gnn_reference(x, a_hat_f32, params)
    assert out.shape == (num_nodes, encoder_dim)
    assert jnp.all(jnp.isfinite(out))
    # bf16 MXU inputs with f32 accumulation -> loosened tolerance vs f32 ref.
    assert jnp.allclose(out, ref, atol=5e-2, rtol=5e-2)

    print("KERNEL_OK")
</pallas_src>

<mosaic_0001>
module attributes {stable_mosaic.version = 11 : i64} {
  func.func @fused_gnn_kernel(%arg0: memref<32x32xbf16, #tpu.memory_space<vmem>>, %arg1: memref<32x128xbf16, #tpu.memory_space<vmem>>, %arg2: memref<128x128xbf16, #tpu.memory_space<vmem>>, %arg3: memref<1x128xf32, #tpu.memory_space<vmem>>, %arg4: memref<128x128xbf16, #tpu.memory_space<vmem>>, %arg5: memref<1x128xf32, #tpu.memory_space<vmem>>, %arg6: memref<32x128xf32, #tpu.memory_space<vmem>>) attributes {dimension_semantics = [], scalar_prefetch = 0 : i64, scratch_operands = 0 : i64, tpu.core_type = #tpu.core_type<tc>} {
    %c0 = arith.constant 0 : index
    %c0_0 = arith.constant 0 : index
    %0 = vector.load %arg1[%c0, %c0_0] : memref<32x128xbf16, #tpu.memory_space<vmem>>, vector<32x128xbf16>
    %c0_1 = arith.constant 0 : index
    %c0_2 = arith.constant 0 : index
    %1 = vector.load %arg2[%c0_1, %c0_2] : memref<128x128xbf16, #tpu.memory_space<vmem>>, vector<128x128xbf16>
    %cst = arith.constant dense<0.000000e+00> : vector<32x128xf32>
    %2 = tpu.matmul %0, %1, %cst {dimension_numbers = #tpu.dot_dimension_numbers<[1], [0], [0], [1], [0, 0, 1, 1], [], []>} : vector<32x128xbf16>, vector<128x128xbf16>, vector<32x128xf32> -> vector<32x128xf32>
    %c0_3 = arith.constant 0 : index
    %c0_4 = arith.constant 0 : index
    %3 = vector.load %arg0[%c0_3, %c0_4] : memref<32x32xbf16, #tpu.memory_space<vmem>>, vector<32x32xbf16>
    %4 = arith.truncf %2 : vector<32x128xf32> to vector<32x128xbf16>
    %cst_5 = arith.constant dense<0.000000e+00> : vector<32x128xf32>
    %5 = tpu.matmul %3, %4, %cst_5 {dimension_numbers = #tpu.dot_dimension_numbers<[1], [0], [0], [1], [0, 0, 1, 1], [], []>} : vector<32x32xbf16>, vector<32x128xbf16>, vector<32x128xf32> -> vector<32x128xf32>
    %c0_6 = arith.constant 0 : index
    %c0_7 = arith.constant 0 : index
    %6 = vector.load %arg3[%c0_6, %c0_7] : memref<1x128xf32, #tpu.memory_space<vmem>>, vector<1x128xf32>
    %7 = vector.broadcast %6 : vector<1x128xf32> to vector<32x128xf32>
    %8 = arith.addf %5, %7 : vector<32x128xf32>
    %cst_8 = arith.constant 0.000000e+00 : f32
    %9 = vector.broadcast %cst_8 : f32 to vector<32x128xf32>
    %10 = arith.maximumf %8, %9 : vector<32x128xf32>
    %11 = arith.truncf %10 : vector<32x128xf32> to vector<32x128xbf16>
    %c0_9 = arith.constant 0 : index
    %c0_10 = arith.constant 0 : index
    %12 = vector.load %arg4[%c0_9, %c0_10] : memref<128x128xbf16, #tpu.memory_space<vmem>>, vector<128x128xbf16>
    %cst_11 = arith.constant dense<0.000000e+00> : vector<32x128xf32>
    %13 = tpu.matmul %11, %12, %cst_11 {dimension_numbers = #tpu.dot_dimension_numbers<[1], [0], [0], [1], [0, 0, 1, 1], [], []>} : vector<32x128xbf16>, vector<128x128xbf16>, vector<32x128xf32> -> vector<32x128xf32>
    %c0_12 = arith.constant 0 : index
    %c0_13 = arith.constant 0 : index
    %14 = vector.load %arg0[%c0_12, %c0_13] : memref<32x32xbf16, #tpu.memory_space<vmem>>, vector<32x32xbf16>
    %15 = arith.truncf %13 : vector<32x128xf32> to vector<32x128xbf16>
    %cst_14 = arith.constant dense<0.000000e+00> : vector<32x128xf32>
    %16 = tpu.matmul %14, %15, %cst_14 {dimension_numbers = #tpu.dot_dimension_numbers<[1], [0], [0], [1], [0, 0, 1, 1], [], []>} : vector<32x32xbf16>, vector<32x128xbf16>, vector<32x128xf32> -> vector<32x128xf32>
    %c0_15 = arith.constant 0 : index
    %c0_16 = arith.constant 0 : index
    %17 = vector.load %arg5[%c0_15, %c0_16] : memref<1x128xf32, #tpu.memory_space<vmem>>, vector<1x128xf32>
    %18 = vector.broadcast %17 : vector<1x128xf32> to vector<32x128xf32>
    %19 = arith.addf %16, %18 : vector<32x128xf32>
    %c0_17 = arith.constant 0 : index
    %c0_18 = arith.constant 0 : index
    %20 = vector.load %arg6[%c0_17, %c0_18] : memref<32x128xf32, #tpu.memory_space<vmem>>, vector<32x128xf32>
    tpu.vector_store %arg6[%c0_17, %c0_18], %19 {strides = array<i32>} : memref<32x128xf32, #tpu.memory_space<vmem>>, vector<32x128xf32>,
    return
  }
}

</mosaic_0001>

<llo_original>
// kernel: tpu_custom_call.1
$region0: #{tpu_custom_call.1}
  #allocation0 [shape = 'u32[]', space=smem, size = 0x4, offset = 0x4, fixed_abs, tag = 'smem constant byte address 0x4 - core index']
  #allocation1 [shape = 'u32[144,128]{1,0:T(1,128)}', space=vmem, size = 0x12000, scoped, tag = 'internal scratch']
  %s0 = inlined_call_operand.hbm [shape: bf16[32,32], index: 0, kind: input, shape index: {}]
  %s1 = inlined_call_operand.hbm [shape: bf16[32,128], index: 1, kind: input, shape index: {}]
  %s2 = inlined_call_operand.hbm [shape: bf16[128,128], index: 2, kind: input, shape index: {}]
  %s3 = inlined_call_operand.vmem [shape: f32[1,128], index: 3, kind: input, shape index: {}]
  %s4 = inlined_call_operand.hbm [shape: bf16[128,128], index: 4, kind: input, shape index: {}]
  %s5 = inlined_call_operand.vmem [shape: f32[1,128], index: 5, kind: input, shape index: {}]
  %s6 = inlined_call_operand.hbm [shape: f32[32,128], index: 6, kind: output, shape index: {}]
  %s7 = sld [smem:[#allocation0]]
  $region50: #{tpu_custom_call.1} parent=0
    _
  %s9 = ssub.s32 1, %s7
  %s10 = scalar_select 0, %s9, %s7
  $region1: #{tpu_custom_call.1} parent=0
    #allocation2 [shape = 'u8[8192]{0}', space=vmem, size = 0x2000, scoped, tag = 'input window, operand 0, single buffered']
    #allocation3 [shape = 's32[1]{0}', space=sflag, size = 0x4, scoped, tag = 'scoped memory for tpu_custom_call.1']
    #allocation4 [shape = 's32[1]{0}', space=sflag, size = 0x4, scoped, tag = 'scoped memory for tpu_custom_call.1']
    #allocation5 [shape = 'u8[8192]{0}', space=vmem, size = 0x2000, scoped, tag = 'input window, operand 1, single buffered']
    #allocation6 [shape = 's32[1]{0}', space=sflag, size = 0x4, scoped, tag = 'scoped memory for tpu_custom_call.1']
    #allocation7 [shape = 'u8[32768]{0}', space=vmem, size = 0x8000, scoped, tag = 'input window, operand 2, single buffered']
    #allocation8 [shape = 'u8[32768]{0}', space=vmem, size = 0x8000, scoped, tag = 'input window, operand 4, single buffered']
    #allocation9 [shape = 's32[1]{0}', space=sflag, size = 0x4, scoped, tag = 'scoped memory for tpu_custom_call.1']
    #allocation10 [shape = 'u8[16384]{0}', space=vmem, size = 0x4000, scoped, tag = 'output window, operand 0, single buffered']
    %11 = vsyncpa [#allocation3], 0
    %12 = vsyncpa [#allocation6], 0
    %13 = vsyncpa [#allocation9], 0
    %14 = vsyncpa [#allocation4], 0
    // Predicated region
    $region2: #{tpu_custom_call.1} parent=1 // pred_check
      _
    $region3: #{tpu_custom_call.1} parent=1 // pred_check_branch
      %16 = sbr.rel (0) target = $region5
    $region4: #{tpu_custom_call.1} parent=1 // pred_region
      %s18 = ssub.s32 256, 256
      %19 = vsyncadd [#allocation3], %s18
      %s20 = sshll.u32 [#allocation2], 4
      %s21 = int_to_ptr.vmem [resolvable:$true] %s20
      %26 = dma.hbm_to_vmem [thread:$0]  %s0, 256, %s21, [#allocation3], 64, 64, 4
    $region5: #{tpu_custom_call.1} parent=1 // pred_fallthru
      _
    // Predicated region
    $region6: #{tpu_custom_call.1} parent=1 // pred_check
      _
    $region7: #{tpu_custom_call.1} parent=1 // pred_check_branch
      %28 = sbr.rel (0) target = $region9
    $region8: #{tpu_custom_call.1} parent=1 // pred_region
      %s30 = ssub.s32 256, 256
      %31 = vsyncadd [#allocation6], %s30
      %s32 = sshll.u32 [#allocation5], 4
      %s33 = int_to_ptr.vmem [resolvable:$true] %s32
      %38 = dma.hbm_to_vmem [thread:$0]  %s1, 256, %s33, [#allocation6], 64, 64, 4
    $region9: #{tpu_custom_call.1} parent=1 // pred_fallthru
      _
    // Predicated region
    $region10: #{tpu_custom_call.1} parent=1 // pred_check
      _
    $region11: #{tpu_custom_call.1} parent=1 // pred_check_branch
      %40 = sbr.rel (0) target = $region13
    $region12: #{tpu_custom_call.1} parent=1 // pred_region
      %s42 = ssub.s32 1024, 1024
      %43 = vsyncadd [#allocation6], %s42
      %s44 = sshll.u32 [#allocation7], 4
      %s45 = int_to_ptr.vmem [resolvable:$true] %s44
      %50 = dma.hbm_to_vmem [thread:$0]  %s2, 1024, %s45, [#allocation6], 64, 64, 4
    $region13: #{tpu_custom_call.1} parent=1 // pred_fallthru
      _
    // Predicated region
    $region14: #{tpu_custom_call.1} parent=1 // pred_check
      _
    $region15: #{tpu_custom_call.1} parent=1 // pred_check_branch
      %52 = sbr.rel (0) target = $region17
    $region16: #{tpu_custom_call.1} parent=1 // pred_region
      _
    $region17: #{tpu_custom_call.1} parent=1 // pred_fallthru
      _
    // Predicated region
    $region18: #{tpu_custom_call.1} parent=1 // pred_check
      _
    $region19: #{tpu_custom_call.1} parent=1 // pred_check_branch
      %54 = sbr.rel (0) target = $region21
    $region20: #{tpu_custom_call.1} parent=1 // pred_region
      %s56 = ssub.s32 1024, 1024
      %57 = vsyncadd [#allocation9], %s56
      %s58 = sshll.u32 [#allocation8], 4
      %s59 = int_to_ptr.vmem [resolvable:$true] %s58
      %64 = dma.hbm_to_vmem [thread:$0]  %s4, 1024, %s59, [#allocation9], 64, 64, 4
    $region21: #{tpu_custom_call.1} parent=1 // pred_fallthru
      _
    // Predicated region
    $region22: #{tpu_custom_call.1} parent=1 // pred_check
      _
    $region23: #{tpu_custom_call.1} parent=1 // pred_check_branch
      %66 = sbr.rel (0) target = $region25
    $region24: #{tpu_custom_call.1} parent=1 // pred_region
      _
    $region25: #{tpu_custom_call.1} parent=1 // pred_fallthru
      _
    // Predicated region
    $region26: #{tpu_custom_call.1} parent=1 // pred_check
      _
    $region27: #{tpu_custom_call.1} parent=1 // pred_check_branch
      %68 = sbr.rel (0) target = $region29
    $region28: #{tpu_custom_call.1} parent=1 // pred_region
      %69 = dma.done [#allocation3], 256
    $region29: #{tpu_custom_call.1} parent=1 // pred_fallthru
      _
    // Predicated region
    $region30: #{tpu_custom_call.1} parent=1 // pred_check
      _
    $region31: #{tpu_custom_call.1} parent=1 // pred_check_branch
      %71 = sbr.rel (0) target = $region33
    $region32: #{tpu_custom_call.1} parent=1 // pred_region
      %72 = dma.done [#allocation6], 256
    $region33: #{tpu_custom_call.1} parent=1 // pred_fallthru
      _
    // Predicated region
    $region34: #{tpu_custom_call.1} parent=1 // pred_check
      _
    $region35: #{tpu_custom_call.1} parent=1 // pred_check_branch
      %74 = sbr.rel (0) target = $region37
    $region36: #{tpu_custom_call.1} parent=1 // pred_region
      %75 = dma.done [#allocation6], 1024
    $region37: #{tpu_custom_call.1} parent=1 // pred_fallthru
      _
    // Predicated region
    $region38: #{tpu_custom_call.1} parent=1 // pred_check
      _
    $region39: #{tpu_custom_call.1} parent=1 // pred_check_branch
      %77 = sbr.rel (0) target = $region41
    $region40: #{tpu_custom_call.1} parent=1 // pred_region
      %78 = dma.done [#allocation9], 1024
    $region41: #{tpu_custom_call.1} parent=1 // pred_fallthru
      _
    %v80 = vld [vmem:[#allocation5] sm:$0xf]
    %v81 = vld [vmem:[#allocation5 + $0x4] sm:$0xf]
    %v82 = vld [vmem:[#allocation5 + $0x8] sm:$0xf]
    %v83 = vld [vmem:[#allocation5 + $0xc] sm:$0xf]
    %v84 = vld [vmem:[#allocation7] sm:$0xf]
    %v85 = vld [vmem:[#allocation7 + $0x4] sm:$0xf]
    %v86 = vld [vmem:[#allocation7 + $0x8] sm:$0xf]
    %v87 = vld [vmem:[#allocation7 + $0xc] sm:$0xf]
    %v88 = vld [vmem:[#allocation7 + $0x10] sm:$0xf]
    %v89 = vld [vmem:[#allocation7 + $0x14] sm:$0xf]
    %v90 = vld [vmem:[#allocation7 + $0x18] sm:$0xf]
    %v91 = vld [vmem:[#allocation7 + $0x1c] sm:$0xf]
    %v92 = vld [vmem:[#allocation7 + $0x20] sm:$0xf]
    %v93 = vld [vmem:[#allocation7 + $0x24] sm:$0xf]
    %v94 = vld [vmem:[#allocation7 + $0x28] sm:$0xf]
    %v95 = vld [vmem:[#allocation7 + $0x2c] sm:$0xf]
    %v96 = vld [vmem:[#allocation7 + $0x30] sm:$0xf]
    %v97 = vld [vmem:[#allocation7 + $0x34] sm:$0xf]
    %v98 = vld [vmem:[#allocation7 + $0x38] sm:$0xf]
    %v99 = vld [vmem:[#allocation7 + $0x3c] sm:$0xf]
    %v104 = vunpack.c.l.b16 %v80
    %v105 = vunpack.c.l.b16 %v81
    %v106 = vunpack.c.l.b16 %v82
    %v107 = vunpack.c.l.b16 %v83
    %v108 = vpack.c.b16 %v105, %v104
    %v109 = vpack.c.b16 %v107, %v106
    %v128 = vunpack.c.l.b16 %v84
    %v129 = vunpack.c.l.b16 %v85
    %v130 = vunpack.c.l.b16 %v86
    %v131 = vunpack.c.l.b16 %v87
    %v132 = vunpack.c.l.b16 %v88
    %v133 = vunpack.c.l.b16 %v89
    %v134 = vunpack.c.l.b16 %v90
    %v135 = vunpack.c.l.b16 %v91
    %v136 = vunpack.c.l.b16 %v92
    %v137 = vunpack.c.l.b16 %v93
    %v138 = vunpack.c.l.b16 %v94
    %v139 = vunpack.c.l.b16 %v95
    %v140 = vunpack.c.l.b16 %v96
    %v141 = vunpack.c.l.b16 %v97
    %v142 = vunpack.c.l.b16 %v98
    %v143 = vunpack.c.l.b16 %v99
    %v144 = vpack.c.b16 %v129, %v128
    %v145 = vpack.c.b16 %v131, %v130
    %v146 = vpack.c.b16 %v133, %v132
    %v147 = vpack.c.b16 %v135, %v134
    %v148 = vpack.c.b16 %v137, %v136
    %v149 = vpack.c.b16 %v139, %v138
    %v150 = vpack.c.b16 %v141, %v140
    %v151 = vpack.c.b16 %v143, %v142
    %160 = vmatprep.subr.bf16.mxu0 0
    %161 = vmatpush1.bf16.msra.mxu0 %v144
    %162 = vmatprep.subr.bf16.mxu0 0
    %163 = vmatpush1.bf16.msra.mxu0 %v145
    %164 = vmatprep.subr.bf16.mxu0 0
    %165 = vmatpush1.bf16.msra.mxu0 %v146
    %166 = vmatprep.subr.bf16.mxu0 0
    %167 = vmatpush1.bf16.msra.mxu0 %v147
    %168 = vmatprep.subr.bf16.mxu0 0
    %169 = vmatpush1.bf16.msra.mxu0 %v148
    %170 = vmatprep.subr.bf16.mxu0 0
    %171 = vmatpush1.bf16.msra.mxu0 %v149
    %172 = vmatprep.subr.bf16.mxu0 0
    %173 = vmatpush1.bf16.msra.mxu0 %v150
    %174 = vmatprep.subr.bf16.mxu0 0
    %175 = vmatpush1.bf16.msra.mxu0 %v151
    %176 = vmatprep.subr.bf16.mxu0 0
    %177 = vmatpush1.bf16.msra.mxu0 0
    %178 = vmatprep.subr.bf16.mxu0 0
    %179 = vmatpush1.bf16.msra.mxu0 0
    %180 = vmatprep.subr.bf16.mxu0 0
    %181 = vmatpush1.bf16.msra.mxu0 0
    %182 = vmatprep.subr.bf16.mxu0 0
    %183 = vmatpush1.bf16.msra.mxu0 0
    %184 = vmatprep.subr.bf16.mxu0 0
    %185 = vmatpush1.bf16.msra.mxu0 0
    %186 = vmatprep.subr.bf16.mxu0 0
    %187 = vmatpush1.bf16.msra.mxu0 0
    %188 = vmatprep.subr.bf16.mxu0 0
    %189 = vmatpush1.bf16.msra.mxu0 0
    %190 = vmatprep.subr.bf16.mxu0 0
    %191 = vmatpush1.bf16.msra.mxu0 0
    %192 = vmatprep.mubr.bf16.mxu0 0
    %193 = vmatmul.mubr.bf16.gmra.mrb[0].mxu0 %v108
    %v194 = vpop.f32.mrb[0].mxu0
    %v195 = vadd.f32 0.0, %v194
    %v196 = vpop.f32.mrb[0].mxu0
    %v197 = vpop.f32.mrb[0].mxu0
    %v198 = vadd.f32 0.0, %v197
    %v199 = vpop.f32.mrb[0].mxu0
    %200 = vmatprep.mubr.bf16.mxu0 0
    %201 = vmatmul.mubr.bf16.gmra.mrb[0].mxu0 %v109
    %v202 = vpop.f32.mrb[0].mxu0
    %v203 = vadd.f32 0.0, %v202
    %v204 = vpop.f32.mrb[0].mxu0
    %v205 = vpop.f32.mrb[0].mxu0
    %v206 = vadd.f32 0.0, %v205
    %v207 = vpop.f32.mrb[0].mxu0
    %208 = vdwg.mxu0
    %v209 = vld [vmem:[#allocation2] sm:$0xf]
    %v210 = vld [vmem:[#allocation2 + $0x4] sm:$0xf]
    %v211 = vld [vmem:[#allocation2 + $0x8] sm:$0xf]
    %v212 = vld [vmem:[#allocation2 + $0xc] sm:$0xf]
    %v213 = vpack.c.bf16 %v198, %v195
    %v214 = vpack.c.bf16 %v206, %v203
    %v215 = vld [vmem:[%s3] sm:$0x1]
    %v217 = vlaneseq
    %v218 = vshrl.u32 %v217, 7
    %v219 = vsub.s32 0, %v218
    %v220 = vrot.slane %v215, %v219
    %v226 = vunpack.c.l.b16 %v209
    %v227 = vunpack.c.l.b16 %v210
    %v228 = vunpack.c.l.b16 %v211
    %v229 = vunpack.c.l.b16 %v212
    %v230 = vpack.c.b16 %v227, %v226
    %v231 = vpack.c.b16 %v229, %v228
    %vm232 = vcmask 261120
    %v234 = vsel %vm232, %v230, 0
    %v237 = vsel %vm232, %v231, 0
    %239 = vmatprep.subr.bf16.mxu0 0
    %240 = vmatpush1.bf16.msra.mxu0 %v213
    %241 = vmatprep.subr.bf16.mxu0 0
    %242 = vmatpush1.bf16.msra.mxu0 %v214
    %243 = vmatprep.subr.bf16.mxu0 0
    %244 = vmatpush1.bf16.msra.mxu0 0
    %245 = vmatprep.subr.bf16.mxu0 0
    %246 = vmatpush1.bf16.msra.mxu0 0
    %247 = vmatprep.subr.bf16.mxu0 0
    %248 = vmatpush1.bf16.msra.mxu0 0
    %249 = vmatprep.subr.bf16.mxu0 0
    %250 = vmatpush1.bf16.msra.mxu0 0
    %251 = vmatprep.subr.bf16.mxu0 0
    %252 = vmatpush1.bf16.msra.mxu0 0
    %253 = vmatprep.subr.bf16.mxu0 0
    %254 = vmatpush1.bf16.msra.mxu0 0
    %255 = vmatprep.subr.bf16.mxu0 0
    %256 = vmatpush1.bf16.msra.mxu0 0
    %257 = vmatprep.subr.bf16.mxu0 0
    %258 = vmatpush1.bf16.msra.mxu0 0
    %259 = vmatprep.subr.bf16.mxu0 0
    %260 = vmatpush1.bf16.msra.mxu0 0
    %261 = vmatprep.subr.bf16.mxu0 0
    %262 = vmatpush1.bf16.msra.mxu0 0
    %263 = vmatprep.subr.bf16.mxu0 0
    %264 = vmatpush1.bf16.msra.mxu0 0
    %265 = vmatprep.subr.bf16.mxu0 0
    %266 = vmatpush1.bf16.msra.mxu0 0
    %267 = vmatprep.subr.bf16.mxu0 0
    %268 = vmatpush1.bf16.msra.mxu0 0
    %269 = vmatprep.subr.bf16.mxu0 0
    %270 = vmatpush1.bf16.msra.mxu0 0
    %271 = vmatprep.mubr.bf16.mxu0 0
    %272 = vmatmul.mubr.bf16.gmra.mrb[0].mxu0 %v234
    %v273 = vpop.f32.mrb[0].mxu0
    %v274 = vadd.f32 %v220, %v273
    %v275 = vpop.f32.mrb[0].mxu0
    %v276 = vpop.f32.mrb[0].mxu0
    %v277 = vadd.f32 %v220, %v276
    %v278 = vpop.f32.mrb[0].mxu0
    %279 = vmatprep.mubr.bf16.mxu0 0
    %280 = vmatmul.mubr.bf16.gmra.mrb[0].mxu0 %v237
    %v281 = vpop.f32.mrb[0].mxu0
    %v282 = vadd.f32 %v220, %v281
    %v283 = vpop.f32.mrb[0].mxu0
    %v284 = vpop.f32.mrb[0].mxu0
    %v285 = vadd.f32 %v220, %v284
    %v286 = vpop.f32.mrb[0].mxu0
    %287 = vdwg.mxu0
    %v288 = vmax.f32 %v274, 0.0
    %v289 = vmax.f32 %v277, 0.0
    %v290 = vmax.f32 %v282, 0.0
    %v291 = vmax.f32 %v285, 0.0
    %v292 = vpack.c.bf16 %v289, %v288
    %v293 = vpack.c.bf16 %v291, %v290
    %v294 = vld [vmem:[#allocation8] sm:$0xf]
    %v295 = vld [vmem:[#allocation8 + $0x4] sm:$0xf]
    %v296 = vld [vmem:[#allocation8 + $0x8] sm:$0xf]
    %v297 = vld [vmem:[#allocation8 + $0xc] sm:$0xf]
    %v298 = vld [vmem:[#allocation8 + $0x10] sm:$0xf]
    %v299 = vld [vmem:[#allocation8 + $0x14] sm:$0xf]
    %v300 = vld [vmem:[#allocation8 + $0x18] sm:$0xf]
    %v301 = vld [vmem:[#allocation8 + $0x1c] sm:$0xf]
    %v302 = vld [vmem:[#allocation8 + $0x20] sm:$0xf]
    %v303 = vld [vmem:[#allocation8 + $0x24] sm:$0xf]
    %v304 = vld [vmem:[#allocation8 + $0x28] sm:$0xf]
    %v305 = vld [vmem:[#allocation8 + $0x2c] sm:$0xf]
    %v306 = vld [vmem:[#allocation8 + $0x30] sm:$0xf]
    %v307 = vld [vmem:[#allocation8 + $0x34] sm:$0xf]
    %v308 = vld [vmem:[#allocation8 + $0x38] sm:$0xf]
    %v309 = vld [vmem:[#allocation8 + $0x3c] sm:$0xf]
    %v326 = vunpack.c.l.b16 %v294
    %v327 = vunpack.c.l.b16 %v295
    %v328 = vunpack.c.l.b16 %v296
    %v329 = vunpack.c.l.b16 %v297
    %v330 = vunpack.c.l.b16 %v298
    %v331 = vunpack.c.l.b16 %v299
    %v332 = vunpack.c.l.b16 %v300
    %v333 = vunpack.c.l.b16 %v301
    %v334 = vunpack.c.l.b16 %v302
    %v335 = vunpack.c.l.b16 %v303
    %v336 = vunpack.c.l.b16 %v304
    %v337 = vunpack.c.l.b16 %v305
    %v338 = vunpack.c.l.b16 %v306
    %v339 = vunpack.c.l.b16 %v307
    %v340 = vunpack.c.l.b16 %v308
    %v341 = vunpack.c.l.b16 %v309
    %v342 = vpack.c.b16 %v327, %v326
    %v343 = vpack.c.b16 %v329, %v328
    %v344 = vpack.c.b16 %v331, %v330
    %v345 = vpack.c.b16 %v333, %v332
    %v346 = vpack.c.b16 %v335, %v334
    %v347 = vpack.c.b16 %v337, %v336
    %v348 = vpack.c.b16 %v339, %v338
    %v349 = vpack.c.b16 %v341, %v340
    %358 = vmatprep.subr.bf16.mxu0 0
    %359 = vmatpush1.bf16.msra.mxu0 %v342
    %360 = vmatprep.subr.bf16.mxu0 0
    %361 = vmatpush1.bf16.msra.mxu0 %v343
    %362 = vmatprep.subr.bf16.mxu0 0
    %363 = vmatpush1.bf16.msra.mxu0 %v344
    %364 = vmatprep.subr.bf16.mxu0 0
    %365 = vmatpush1.bf16.msra.mxu0 %v345
    %366 = vmatprep.subr.bf16.mxu0 0
    %367 = vmatpush1.bf16.msra.mxu0 %v346
    %368 = vmatprep.subr.bf16.mxu0 0
    %369 = vmatpush1.bf16.msra.mxu0 %v347
    %370 = vmatprep.subr.bf16.mxu0 0
    %371 = vmatpush1.bf16.msra.mxu0 %v348
    %372 = vmatprep.subr.bf16.mxu0 0
    %373 = vmatpush1.bf16.msra.mxu0 %v349
    %374 = vmatprep.subr.bf16.mxu0 0
    %375 = vmatpush1.bf16.msra.mxu0 0
    %376 = vmatprep.subr.bf16.mxu0 0
    %377 = vmatpush1.bf16.msra.mxu0 0
    %378 = vmatprep.subr.bf16.mxu0 0
    %379 = vmatpush1.bf16.msra.mxu0 0
    %380 = vmatprep.subr.bf16.mxu0 0
    %381 = vmatpush1.bf16.msra.mxu0 0
    %382 = vmatprep.subr.bf16.mxu0 0
    %383 = vmatpush1.bf16.msra.mxu0 0
    %384 = vmatprep.subr.bf16.mxu0 0
    %385 = vmatpush1.bf16.msra.mxu0 0
    %386 = vmatprep.subr.bf16.mxu0 0
    %387 = vmatpush1.bf16.msra.mxu0 0
    %388 = vmatprep.subr.bf16.mxu0 0
    %389 = vmatpush1.bf16.msra.mxu0 0
    %390 = vmatprep.mubr.bf16.mxu0 0
    %391 = vmatmul.mubr.bf16.gmra.mrb[0].mxu0 %v292
    %v392 = vpop.f32.mrb[0].mxu0
    %v393 = vadd.f32 0.0, %v392
    %v394 = vpop.f32.mrb[0].mxu0
    %v395 = vpop.f32.mrb[0].mxu0
    %v396 = vadd.f32 0.0, %v395
    %v397 = vpop.f32.mrb[0].mxu0
    %398 = vmatprep.mubr.bf16.mxu0 0
    %399 = vmatmul.mubr.bf16.gmra.mrb[0].mxu0 %v293
    %v400 = vpop.f32.mrb[0].mxu0
    %v401 = vadd.f32 0.0, %v400
    %v402 = vpop.f32.mrb[0].mxu0
    %v403 = vpop.f32.mrb[0].mxu0
    %v404 = vadd.f32 0.0, %v403
    %v405 = vpop.f32.mrb[0].mxu0
    %406 = vdwg.mxu0
    %v407 = vpack.c.bf16 %v396, %v393
    %v408 = vpack.c.bf16 %v404, %v401
    %v409 = vld [vmem:[%s5] sm:$0x1]
    %v411 = vlaneseq
    %v412 = vshrl.u32 %v411, 7
    %v413 = vsub.s32 0, %v412
    %v414 = vrot.slane %v409, %v413
    %416 = vmatprep.subr.bf16.mxu0 0
    %417 = vmatpush1.bf16.msra.mxu0 %v407
    %418 = vmatprep.subr.bf16.mxu0 0
    %419 = vmatpush1.bf16.msra.mxu0 %v408
    %420 = vmatprep.subr.bf16.mxu0 0
    %421 = vmatpush1.bf16.msra.mxu0 0
    %422 = vmatprep.subr.bf16.mxu0 0
    %423 = vmatpush1.bf16.msra.mxu0 0
    %424 = vmatprep.subr.bf16.mxu0 0
    %425 = vmatpush1.bf16.msra.mxu0 0
    %426 = vmatprep.subr.bf16.mxu0 0
    %427 = vmatpush1.bf16.msra.mxu0 0
    %428 = vmatprep.subr.bf16.mxu0 0
    %429 = vmatpush1.bf16.msra.mxu0 0
    %430 = vmatprep.subr.bf16.mxu0 0
    %431 = vmatpush1.bf16.msra.mxu0 0
    %432 = vmatprep.subr.bf16.mxu0 0
    %433 = vmatpush1.bf16.msra.mxu0 0
    %434 = vmatprep.subr.bf16.mxu0 0
    %435 = vmatpush1.bf16.msra.mxu0 0
    %436 = vmatprep.subr.bf16.mxu0 0
    %437 = vmatpush1.bf16.msra.mxu0 0
    %438 = vmatprep.subr.bf16.mxu0 0
    %439 = vmatpush1.bf16.msra.mxu0 0
    %440 = vmatprep.subr.bf16.mxu0 0
    %441 = vmatpush1.bf16.msra.mxu0 0
    %442 = vmatprep.subr.bf16.mxu0 0
    %443 = vmatpush1.bf16.msra.mxu0 0
    %444 = vmatprep.subr.bf16.mxu0 0
    %445 = vmatpush1.bf16.msra.mxu0 0
    %446 = vmatprep.subr.bf16.mxu0 0
    %447 = vmatpush1.bf16.msra.mxu0 0
    %448 = vmatprep.mubr.bf16.mxu0 0
    %449 = vmatmul.mubr.bf16.gmra.mrb[0].mxu0 %v234
    %v450 = vpop.f32.mrb[0].mxu0
    %v451 = vadd.f32 %v414, %v450
    %v452 = vpop.f32.mrb[0].mxu0
    %v453 = vpop.f32.mrb[0].mxu0
    %v454 = vadd.f32 %v414, %v453
    %v455 = vpop.f32.mrb[0].mxu0
    %456 = vmatprep.mubr.bf16.mxu0 0
    %457 = vmatmul.mubr.bf16.gmra.mrb[0].mxu0 %v237
    %v458 = vpop.f32.mrb[0].mxu0
    %v459 = vadd.f32 %v414, %v458
    %v460 = vpop.f32.mrb[0].mxu0
    %v461 = vpop.f32.mrb[0].mxu0
    %v462 = vadd.f32 %v414, %v461
    %v463 = vpop.f32.mrb[0].mxu0
    %464 = vdwg.mxu0
    %465 = vst [vmem:[#allocation10] sm:$0xff] %v451
    %466 = vst [vmem:[#allocation10 + $0x8] sm:$0xff] %v454
    %467 = vst [vmem:[#allocation10 + $0x10] sm:$0xff] %v459
    %468 = vst [vmem:[#allocation10 + $0x18] sm:$0xff] %v462
    // Predicated region
    $region42: #{tpu_custom_call.1} parent=1 // pred_check
      _
    $region43: #{tpu_custom_call.1} parent=1 // pred_check_branch
      %470 = sbr.rel (0) target = $region45
    $region44: #{tpu_custom_call.1} parent=1 // pred_region
      %s472 = ssub.s32 512, 512
      %473 = vsyncadd [#allocation4], %s472
      %s474 = sshll.u32 [#allocation10], 4
      %s475 = int_to_ptr.vmem [resolvable:$true] %s474
      %480 = dma.vmem_to_hbm [thread:$0]  %s475, 512, %s6, [#allocation4], 128, 128, 8
    $region45: #{tpu_custom_call.1} parent=1 // pred_fallthru
      _
    // Predicated region
    $region46: #{tpu_custom_call.1} parent=1 // pred_check
      _
    $region47: #{tpu_custom_call.1} parent=1 // pred_check_branch
      %482 = sbr.rel (0) target = $region49
    $region48: #{tpu_custom_call.1} parent=1 // pred_region
      %483 = dma.done [#allocation4], 512
    $region49: #{tpu_custom_call.1} parent=1 // pred_fallthru
      _
    %484 = vsyncpa [#allocation3], 1
    %485 = vsyncpa [#allocation6], 1
    %486 = vsyncpa [#allocation9], 1
    %487 = vsyncpa [#allocation4], 1

</llo_original>
